<compile_context>
chip_gen: v7x
topology: tpu7x:2x2x1
jax: 0.10.0
libtpu: 0.0.40
codegen_flags: <defaults>
</compile_context>

<pallas_src>
import functools
import math

import jax
import jax.numpy as jnp
from jax.experimental import pallas as pl
from jax.experimental.pallas import tpu as pltpu

_LANE = 128


def _round_up(x, n):
    return (x + n - 1) // n * n


def _choose_pack(m, c_in, c_z):
    """Largest power-of-two row-packing factor P (<=32) that divides m and
    keeps the block-diagonal weight / packed row widths reasonable."""
    p = 1
    while True:
        q = 2 * p
        if q > 32 or m % q != 0 or q * c_in > 256 or q * c_z > 2048:
            break
        p = q
    return p


def _choose_row_tile(md, kd, nd, itemsize, target_rows):
    """Dense-row tile: big enough to hide per-step overhead, small enough that
    the double-buffered input+output working set stays ~<= 10 MiB."""
    if md <= 8:
        return md
    budget = 10 * 1024 * 1024
    per_row = (_round_up(kd, _LANE) + _round_up(nd, _LANE)) * itemsize * 2
    cap = max(8, budget // per_row)
    tmd = min(target_rows, cap, md)
    if tmd >= md:
        return md
    return max(8, (tmd // 8) * 8)


def _linear_kernel(x_ref, w_ref, b_ref, o_ref):
    # x_ref: (TMD, KD)  w_ref: (KD, ND)  b_ref: (1, ND) f32  o_ref: (TMD, ND)
    acc = jnp.dot(x_ref[...], w_ref[...], preferred_element_type=jnp.float32)
    acc = acc + b_ref[...]
    o_ref[...] = acc.astype(o_ref.dtype)


@functools.partial(jax.jit, static_argnames=("tm",))
def secondary_structure_embedder(ss, weight, bias, *, tm=32768):
    """ss: [..., c_in]; weight: [c_z, c_in] (torch layout); bias: [c_z]."""
    c_z, c_in = weight.shape
    orig_shape = ss.shape
    assert orig_shape[-1] == c_in
    m = math.prod(orig_shape[:-1])

    out_dtype = ss.dtype
    itemsize = jnp.dtype(ss.dtype).itemsize

    # Row packing for lane-dense HBM tiles.
    pack = _choose_pack(m, c_in, c_z)
    md = m // pack            # packed (lane-dense) rows
    kd = pack * c_in          # packed input width
    nd = pack * c_z           # packed output width

    x = ss.reshape(md, kd)    # free metadata reshape (row-major contiguous)

    w = weight.T              # (c_in, c_z) so kernel does x @ w
    if pack > 1:
        # Block-diagonal expansion: (kd, nd) = block_diag(w, ..., w)
        w_big = jnp.kron(jnp.eye(pack, dtype=w.dtype), w)
        b_big = jnp.tile(bias, pack)
    else:
        w_big, b_big = w, bias
    b_big = b_big.astype(jnp.float32).reshape(1, nd)

    tmd = _choose_row_tile(md, kd, nd, itemsize, max(8, tm // pack))
    grid = (pl.cdiv(md, tmd),)

    cost = pl.CostEstimate(
        flops=2 * md * kd * nd,
        transcendentals=0,
        bytes_accessed=(md * kd + md * nd) * itemsize
        + kd * nd * jnp.dtype(w_big.dtype).itemsize
        + nd * 4,
    )

    out = pl.pallas_call(
        _linear_kernel,
        out_shape=jax.ShapeDtypeStruct((md, nd), out_dtype),
        grid_spec=pltpu.PrefetchScalarGridSpec(
            num_scalar_prefetch=0,
            grid=grid,
            in_specs=[
                pl.BlockSpec((tmd, kd), lambda i: (i, 0)),
                pl.BlockSpec((kd, nd), lambda i: (0, 0)),   # VMEM-resident
                pl.BlockSpec((1, nd), lambda i: (0, 0)),    # VMEM-resident
            ],
            out_specs=pl.BlockSpec((tmd, nd), lambda i: (i, 0)),
        ),
        compiler_params=pltpu.CompilerParams(
            dimension_semantics=("parallel",),   # megacore-shard M on v7x
            vmem_limit_bytes=32 * 1024 * 1024,
        ),
        cost_estimate=cost,
    )(x, w_big, b_big)

    return out.reshape(*orig_shape[:-1], c_z)


if __name__ == "__main__":
    key = jax.random.PRNGKey(0)
    k_ss, k_w, k_b, k_ss2 = jax.random.split(key, 4)

    # Pair-feature style input: ss [batch, N_res, N_res, c_in], c_in=4, c_z=32.
    batch, n_res, c_in, c_z = 2, 8, 4, 32
    ss = jax.random.normal(k_ss, (batch, n_res, n_res, c_in), dtype=jnp.float32)
    weight = jax.random.normal(k_w, (c_z, c_in), dtype=jnp.float32) * 0.1
    bias = jax.random.normal(k_b, (c_z,), dtype=jnp.float32) * 0.1

    out = jax.block_until_ready(secondary_structure_embedder(ss, weight, bias))
    ref = jnp.einsum("...i,oi->...o", ss, weight) + bias
    assert out.shape == (batch, n_res, n_res, c_z)
    assert jnp.allclose(out, ref, atol=1e-5, rtol=1e-5)

    # Also exercise the multi-tile path with a masked boundary block
    # (320 rows, small row tile -> 10 dense rows, tile 8, grid of 2).
    ss2 = jax.random.normal(k_ss2, (1, 40, 8, c_in), dtype=jnp.float32)
    out2 = jax.block_until_ready(
        secondary_structure_embedder(ss2, weight, bias, tm=256))
    ref2 = jnp.einsum("...i,oi->...o", ss2, weight) + bias
    assert out2.shape == (1, 40, 8, c_z)
    assert jnp.allclose(out2, ref2, atol=1e-5, rtol=1e-5)

    print("KERNEL_OK")
</pallas_src>

<mosaic_0001>
module attributes {stable_mosaic.version = 11 : i64} {
  func.func @_linear_kernel(%arg0: i32, %arg1: memref<4x128xf32, #tpu.memory_space<vmem>>, %arg2: memref<128x1024xf32, #tpu.memory_space<vmem>>, %arg3: memref<1x1024xf32, #tpu.memory_space<vmem>>, %arg4: memref<4x1024xf32, #tpu.memory_space<vmem>>) attributes {dimension_semantics = [#tpu.dimension_semantics<parallel>], iteration_bounds = array<i64: 1>, scalar_prefetch = 0 : i64, scratch_operands = 0 : i64, tpu.core_type = #tpu.core_type<tc>, window_params = [{transform_indices = @transform_0, window_bounds = array<i64: 4, 128>}, {pipeline_mode = #tpu.pipeline_mode<synchronous>, transform_indices = @transform_1, window_bounds = array<i64: 128, 1024>}, {pipeline_mode = #tpu.pipeline_mode<synchronous>, transform_indices = @transform_2, window_bounds = array<i64: 1, 1024>}, {transform_indices = @transform_3, window_bounds = array<i64: 4, 1024>}]} {
    %c0 = arith.constant 0 : index
    %c0_0 = arith.constant 0 : index
    %0 = vector.load %arg1[%c0, %c0_0] : memref<4x128xf32, #tpu.memory_space<vmem>>, vector<4x128xf32>
    %c0_1 = arith.constant 0 : index
    %c0_2 = arith.constant 0 : index
    %1 = vector.load %arg2[%c0_1, %c0_2] : memref<128x1024xf32, #tpu.memory_space<vmem>>, vector<128x1024xf32>
    %cst = arith.constant dense<0.000000e+00> : vector<4x1024xf32>
    %2 = tpu.matmul %0, %1, %cst {dimension_numbers = #tpu.dot_dimension_numbers<[1], [0], [0], [1], [0, 0, 1, 1], [], []>} : vector<4x128xf32>, vector<128x1024xf32>, vector<4x1024xf32> -> vector<4x1024xf32>
    %c0_3 = arith.constant 0 : index
    %c0_4 = arith.constant 0 : index
    %3 = vector.load %arg3[%c0_3, %c0_4] : memref<1x1024xf32, #tpu.memory_space<vmem>>, vector<1x1024xf32>
    %4 = vector.broadcast %3 : vector<1x1024xf32> to vector<4x1024xf32>
    %5 = arith.addf %2, %4 : vector<4x1024xf32>
    %c0_5 = arith.constant 0 : index
    %c0_6 = arith.constant 0 : index
    %6 = vector.load %arg4[%c0_5, %c0_6] : memref<4x1024xf32, #tpu.memory_space<vmem>>, vector<4x1024xf32>
    tpu.vector_store %arg4[%c0_5, %c0_6], %5 {strides = array<i32>} : memref<4x1024xf32, #tpu.memory_space<vmem>>, vector<4x1024xf32>,
    return
  }
  func.func @transform_0(%arg0: i32) -> (i32, i32) {
    %c0_i32 = arith.constant 0 : i32
    %c0_i32_0 = arith.constant 0 : i32
    return %arg0, %c0_i32 : i32, i32
  }
  func.func @transform_1(%arg0: i32) -> (i32, i32) {
    %c0_i32 = arith.constant 0 : i32
    %c0_i32_0 = arith.constant 0 : i32
    %c0_i32_1 = arith.constant 0 : i32
    return %c0_i32, %c0_i32_0 : i32, i32
  }
  func.func @transform_2(%arg0: i32) -> (i32, i32) {
    %c0_i32 = arith.constant 0 : i32
    %c0_i32_0 = arith.constant 0 : i32
    %c0_i32_1 = arith.constant 0 : i32
    return %c0_i32, %c0_i32_0 : i32, i32
  }
  func.func @transform_3(%arg0: i32) -> (i32, i32) {
    %c0_i32 = arith.constant 0 : i32
    %c0_i32_0 = arith.constant 0 : i32
    return %arg0, %c0_i32 : i32, i32
  }
}

</mosaic_0001>

<llo_original>
// kernel: tile.8
$region0: #{tile.8}
  #allocation0 [shape = 's32[1]{0}', space=sflag, size = 0x4, scoped, tag = 'scoped memory for tile.8']
  %s0 = inlined_call_operand.vmem [shape: f32[32], index: 0, kind: input, shape index: {}]
  %s1 = inlined_call_operand.vmem [shape: f32[32,32], index: 1, kind: output, shape index: {}]
  // Predicated region
  $region2: #{tile.8} parent=0 // pred_check
    _
  $region3: #{tile.8} parent=0 // pred_check_branch
    %3 = sbr.rel (0) target = $region5
  $region4: #{tile.8} parent=0 // pred_region
    _
  $region5: #{tile.8} parent=0 // pred_fallthru
    _
  %v4 = vld [vmem:[%s0] ss:$0 sm:$0xff]
  %5 = vst [vmem:[%s1] sm:$0xff] %v4
  %s6 = scalar_lea.vmem %s1, 8
  %7 = vst [vmem:[%s6] sm:$0xff] %v4
  %s8 = scalar_lea.vmem %s1, 16
  %9 = vst [vmem:[%s8] sm:$0xff] %v4
  %s10 = scalar_lea.vmem %s1, 24
  %11 = vst [vmem:[%s10] sm:$0xff] %v4

// kernel: tile.9
$region0: #{tile.9}
  %s0 = inlined_call_operand.vmem [shape: f32[32,32], index: 0, kind: input, shape index: {}]
  %s1 = inlined_call_operand.vmem [shape: f32[1,1024], index: 1, kind: output, shape index: {}]
  $region1: #{tile.9} parent=0
    #allocation0 [shape = 'u8[32768]{0}', space=vmem, size = 0x8000, scoped, tag = 'scoped mem for output reshape']
    %v2 = vld [vmem:[%s0] ss:$4 sm:$0xff]
    %vm3 = vcmask 261120
    %4 = vst.msk [vmem:[#allocation0] ss:$8 sm:$0xf] %vm3, %v2
    %5 = vst.msk [vmem:[#allocation0] ss:$8 sm:$0xf0] %vm3, %v2
    %s6 = scalar_lea.vmem %s0, 3
    %v7 = vld [vmem:[%s6] ss:$4 sm:$0xff]
    %8 = vrot.lane.b32.xlu0 %v7, 96
    %v9 = vpop.permute.xlu0 %8
    %vm10 = vcmask 1048320
    %11 = vst.msk [vmem:[#allocation0] ss:$8 sm:$0xf] %vm10, %v9
    %12 = vst.msk [vmem:[#allocation0] ss:$8 sm:$0xf0] %vm10, %v9
    %s13 = scalar_lea.vmem %s0, 2
    %v14 = vld [vmem:[%s13] ss:$4 sm:$0xff]
    %15 = vrot.lane.b32.xlu0 %v14, 64
    %v16 = vpop.permute.xlu0 %15
    %vm17 = vcmask 785920
    %18 = vst.msk [vmem:[#allocation0] ss:$8 sm:$0xf] %vm17, %v16
    %19 = vst.msk [vmem:[#allocation0] ss:$8 sm:$0xf0] %vm17, %v16
    %s20 = scalar_lea.vmem %s0, 1
    %v21 = vld [vmem:[%s20] ss:$4 sm:$0xff]
    %22 = vrot.lane.b32.xlu0 %v21, 32
    %v23 = vpop.permute.xlu0 %22
    %vm24 = vcmask 523520
    %25 = vst.msk [vmem:[#allocation0] ss:$8 sm:$0xf] %vm24, %v23
    %26 = vst.msk [vmem:[#allocation0] ss:$8 sm:$0xf0] %vm24, %v23
    %s28 = sshllo.u32 0, 1
    %v30 = vld [vmem:[#allocation0] sm:%s28]
    %s31 = sshllo.u32 0, 1
    %32 = vst [vmem:[%s1] sm:%s31] %v30
    %s33 = scalar_lea.vmem [#allocation0], 8
    %v34 = vld [vmem:[%s33] sm:%s28]
    %s35 = sshllo.u32 0, 1
    %s36 = scalar_lea.vmem %s1, 1
    %37 = vst [vmem:[%s36] sm:%s35] %v34
    %s38 = scalar_lea.vmem [#allocation0], 16
    %v39 = vld [vmem:[%s38] sm:%s28]
    %s40 = sshllo.u32 0, 1
    %s41 = smul.addr 1, 2
    %s42 = scalar_lea.vmem %s1, %s41
    %43 = vst [vmem:[%s42] sm:%s40] %v39
    %s44 = scalar_lea.vmem [#allocation0], 24
    %v45 = vld [vmem:[%s44] sm:%s28]
    %s46 = sshllo.u32 0, 1
    %s47 = smul.addr 1, 3
    %s48 = scalar_lea.vmem %s1, %s47
    %49 = vst [vmem:[%s48] sm:%s46] %v45
    %s50 = scalar_lea.vmem [#allocation0], 32
    %v51 = vld [vmem:[%s50] sm:%s28]
    %s52 = sshllo.u32 0, 1
    %s53 = smul.addr 1, 4
    %s54 = scalar_lea.vmem %s1, %s53
    %55 = vst [vmem:[%s54] sm:%s52] %v51
    %s56 = scalar_lea.vmem [#allocation0], 40
    %v57 = vld [vmem:[%s56] sm:%s28]
    %s58 = sshllo.u32 0, 1
    %s59 = smul.addr 1, 5
    %s60 = scalar_lea.vmem %s1, %s59
    %61 = vst [vmem:[%s60] sm:%s58] %v57
    %s62 = scalar_lea.vmem [#allocation0], 48
    %v63 = vld [vmem:[%s62] sm:%s28]
    %s64 = sshllo.u32 0, 1
    %s65 = smul.addr 1, 6
    %s66 = scalar_lea.vmem %s1, %s65
    %67 = vst [vmem:[%s66] sm:%s64] %v63
    %s68 = scalar_lea.vmem [#allocation0], 56
    %v69 = vld [vmem:[%s68] sm:%s28]
    %s70 = sshllo.u32 0, 1
    %s71 = smul.addr 1, 7
    %s72 = scalar_lea.vmem %s1, %s71
    %73 = vst [vmem:[%s72] sm:%s70] %v69

// kernel: secondary_structure_embedder.1
$region0: #{secondary_structure_embedder.1}
  #allocation0 [shape = 'u32[]', space=smem, size = 0x4, offset = 0x4, fixed_abs, tag = 'smem constant byte address 0x4 - core index']
  #allocation1 [shape = 'u32[144,128]{1,0:T(1,128)}', space=vmem, size = 0x12000, scoped, tag = 'internal scratch']
  %s0 = inlined_call_operand.vmem [shape: f32[4,128], index: 0, kind: input, shape index: {}]
  %s1 = inlined_call_operand.vmem [shape: f32[128,1024], index: 1, kind: input, shape index: {}]
  %s2 = inlined_call_operand.vmem [shape: f32[1,1024], index: 2, kind: input, shape index: {}]
  %s3 = inlined_call_operand.vmem [shape: f32[4,1024], index: 3, kind: output, shape index: {}]
  %s4 = sld [smem:[#allocation0]]
  $region22: #{secondary_structure_embedder.1} parent=0
    _
  %s6 = ssub.s32 1, %s4
  %s7 = scalar_select 0, %s6, %s4
  // Predicated region
  $region2: #{secondary_structure_embedder.1} parent=0 // pred_check
    _
  $region3: #{secondary_structure_embedder.1} parent=0 // pred_check_branch
    %9 = sbr.rel (0) target = $region5
  $region4: #{secondary_structure_embedder.1} parent=0 // pred_region
    _
  $region5: #{secondary_structure_embedder.1} parent=0 // pred_fallthru
    _
  // Predicated region
  $region6: #{secondary_structure_embedder.1} parent=0 // pred_check
    _
  $region7: #{secondary_structure_embedder.1} parent=0 // pred_check_branch
    %11 = sbr.rel (0) target = $region9
  $region8: #{secondary_structure_embedder.1} parent=0 // pred_region
    _
  $region9: #{secondary_structure_embedder.1} parent=0 // pred_fallthru
    _
  // Predicated region
  $region10: #{secondary_structure_embedder.1} parent=0 // pred_check
    _
  $region11: #{secondary_structure_embedder.1} parent=0 // pred_check_branch
    %13 = sbr.rel (0) target = $region13
  $region12: #{secondary_structure_embedder.1} parent=0 // pred_region
    _
  $region13: #{secondary_structure_embedder.1} parent=0 // pred_fallthru
    _
  %v14 = vld [vmem:[%s0] sm:$0xf]
  %v15 = vld [vmem:[%s1] sm:$0xff]
  %v16 = vld [vmem:[%s1 + $0x8] sm:$0xff]
  %v17 = vld [vmem:[%s1 + $0x10] sm:$0xff]
  %v18 = vld [vmem:[%s1 + $0x18] sm:$0xff]
  %v19 = vld [vmem:[%s1 + $0x20] sm:$0xff]
  %v20 = vld [vmem:[%s1 + $0x28] sm:$0xff]
  %v21 = vld [vmem:[%s1 + $0x30] sm:$0xff]
  %v22 = vld [vmem:[%s1 + $0x38] sm:$0xff]
  %v23 = vld [vmem:[%s1 + $0x40] sm:$0xff]
  %v24 = vld [vmem:[%s1 + $0x48] sm:$0xff]
  %v25 = vld [vmem:[%s1 + $0x50] sm:$0xff]
  %v26 = vld [vmem:[%s1 + $0x58] sm:$0xff]
  %v27 = vld [vmem:[%s1 + $0x60] sm:$0xff]
  %v28 = vld [vmem:[%s1 + $0x68] sm:$0xff]
  %v29 = vld [vmem:[%s1 + $0x70] sm:$0xff]
  %v30 = vld [vmem:[%s1 + $0x78] sm:$0xff]
  %v31 = vld [vmem:[%s1 + $0x80] sm:$0xff]
  %v32 = vld [vmem:[%s1 + $0x88] sm:$0xff]
  %v33 = vld [vmem:[%s1 + $0x90] sm:$0xff]
  %v34 = vld [vmem:[%s1 + $0x98] sm:$0xff]
  %v35 = vld [vmem:[%s1 + $0xa0] sm:$0xff]
  %v36 = vld [vmem:[%s1 + $0xa8] sm:$0xff]
  %v37 = vld [vmem:[%s1 + $0xb0] sm:$0xff]
  %v38 = vld [vmem:[%s1 + $0xb8] sm:$0xff]
  %v39 = vld [vmem:[%s1 + $0xc0] sm:$0xff]
  %v40 = vld [vmem:[%s1 + $0xc8] sm:$0xff]
  %v41 = vld [vmem:[%s1 + $0xd0] sm:$0xff]
  %v42 = vld [vmem:[%s1 + $0xd8] sm:$0xff]
  %v43 = vld [vmem:[%s1 + $0xe0] sm:$0xff]
  %v44 = vld [vmem:[%s1 + $0xe8] sm:$0xff]
  %v45 = vld [vmem:[%s1 + $0xf0] sm:$0xff]
  %v46 = vld [vmem:[%s1 + $0xf8] sm:$0xff]
  %v47 = vld [vmem:[%s1 + $0x100] sm:$0xff]
  %v48 = vld [vmem:[%s1 + $0x108] sm:$0xff]
  %v49 = vld [vmem:[%s1 + $0x110] sm:$0xff]
  %v50 = vld [vmem:[%s1 + $0x118] sm:$0xff]
  %v51 = vld [vmem:[%s1 + $0x120] sm:$0xff]
  %v52 = vld [vmem:[%s1 + $0x128] sm:$0xff]
  %v53 = vld [vmem:[%s1 + $0x130] sm:$0xff]
  %v54 = vld [vmem:[%s1 + $0x138] sm:$0xff]
  %v55 = vld [vmem:[%s1 + $0x140] sm:$0xff]
  %v56 = vld [vmem:[%s1 + $0x148] sm:$0xff]
  %v57 = vld [vmem:[%s1 + $0x150] sm:$0xff]
  %v58 = vld [vmem:[%s1 + $0x158] sm:$0xff]
  %v59 = vld [vmem:[%s1 + $0x160] sm:$0xff]
  %v60 = vld [vmem:[%s1 + $0x168] sm:$0xff]
  %v61 = vld [vmem:[%s1 + $0x170] sm:$0xff]
  %v62 = vld [vmem:[%s1 + $0x178] sm:$0xff]
  %v63 = vld [vmem:[%s1 + $0x180] sm:$0xff]
  %v64 = vld [vmem:[%s1 + $0x188] sm:$0xff]
  %v65 = vld [vmem:[%s1 + $0x190] sm:$0xff]
  %v66 = vld [vmem:[%s1 + $0x198] sm:$0xff]
  %v67 = vld [vmem:[%s1 + $0x1a0] sm:$0xff]
  %v68 = vld [vmem:[%s1 + $0x1a8] sm:$0xff]
  %v69 = vld [vmem:[%s1 + $0x1b0] sm:$0xff]
  %v70 = vld [vmem:[%s1 + $0x1b8] sm:$0xff]
  %v71 = vld [vmem:[%s1 + $0x1c0] sm:$0xff]
  %v72 = vld [vmem:[%s1 + $0x1c8] sm:$0xff]
  %v73 = vld [vmem:[%s1 + $0x1d0] sm:$0xff]
  %v74 = vld [vmem:[%s1 + $0x1d8] sm:$0xff]
  %v75 = vld [vmem:[%s1 + $0x1e0] sm:$0xff]
  %v76 = vld [vmem:[%s1 + $0x1e8] sm:$0xff]
  %v77 = vld [vmem:[%s1 + $0x1f0] sm:$0xff]
  %v78 = vld [vmem:[%s1 + $0x1f8] sm:$0xff]
  %v79 = vld [vmem:[%s1 + $0x200] sm:$0xff]
  %v80 = vld [vmem:[%s1 + $0x208] sm:$0xff]
  %v81 = vld [vmem:[%s1 + $0x210] sm:$0xff]
  %v82 = vld [vmem:[%s1 + $0x218] sm:$0xff]
  %v83 = vld [vmem:[%s1 + $0x220] sm:$0xff]
  %v84 = vld [vmem:[%s1 + $0x228] sm:$0xff]
  %v85 = vld [vmem:[%s1 + $0x230] sm:$0xff]
  %v86 = vld [vmem:[%s1 + $0x238] sm:$0xff]
  %v87 = vld [vmem:[%s1 + $0x240] sm:$0xff]
  %v88 = vld [vmem:[%s1 + $0x248] sm:$0xff]
  %v89 = vld [vmem:[%s1 + $0x250] sm:$0xff]
  %v90 = vld [vmem:[%s1 + $0x258] sm:$0xff]
  %v91 = vld [vmem:[%s1 + $0x260] sm:$0xff]
  %v92 = vld [vmem:[%s1 + $0x268] sm:$0xff]
  %v93 = vld [vmem:[%s1 + $0x270] sm:$0xff]
  %v94 = vld [vmem:[%s1 + $0x278] sm:$0xff]
  %v95 = vld [vmem:[%s1 + $0x280] sm:$0xff]
  %v96 = vld [vmem:[%s1 + $0x288] sm:$0xff]
  %v97 = vld [vmem:[%s1 + $0x290] sm:$0xff]
  %v98 = vld [vmem:[%s1 + $0x298] sm:$0xff]
  %v99 = vld [vmem:[%s1 + $0x2a0] sm:$0xff]
  %v100 = vld [vmem:[%s1 + $0x2a8] sm:$0xff]
  %v101 = vld [vmem:[%s1 + $0x2b0] sm:$0xff]
  %v102 = vld [vmem:[%s1 + $0x2b8] sm:$0xff]
  %v103 = vld [vmem:[%s1 + $0x2c0] sm:$0xff]
  %v104 = vld [vmem:[%s1 + $0x2c8] sm:$0xff]
  %v105 = vld [vmem:[%s1 + $0x2d0] sm:$0xff]
  %v106 = vld [vmem:[%s1 + $0x2d8] sm:$0xff]
  %v107 = vld [vmem:[%s1 + $0x2e0] sm:$0xff]
  %v108 = vld [vmem:[%s1 + $0x2e8] sm:$0xff]
  %v109 = vld [vmem:[%s1 + $0x2f0] sm:$0xff]
  %v110 = vld [vmem:[%s1 + $0x2f8] sm:$0xff]
  %v111 = vld [vmem:[%s1 + $0x300] sm:$0xff]
  %v112 = vld [vmem:[%s1 + $0x308] sm:$0xff]
  %v113 = vld [vmem:[%s1 + $0x310] sm:$0xff]
  %v114 = vld [vmem:[%s1 + $0x318] sm:$0xff]
  %v115 = vld [vmem:[%s1 + $0x320] sm:$0xff]
  %v116 = vld [vmem:[%s1 + $0x328] sm:$0xff]
  %v117 = vld [vmem:[%s1 + $0x330] sm:$0xff]
  %v118 = vld [vmem:[%s1 + $0x338] sm:$0xff]
  %v119 = vld [vmem:[%s1 + $0x340] sm:$0xff]
  %v120 = vld [vmem:[%s1 + $0x348] sm:$0xff]
  %v121 = vld [vmem:[%s1 + $0x350] sm:$0xff]
  %v122 = vld [vmem:[%s1 + $0x358] sm:$0xff]
  %v123 = vld [vmem:[%s1 + $0x360] sm:$0xff]
  %v124 = vld [vmem:[%s1 + $0x368] sm:$0xff]
  %v125 = vld [vmem:[%s1 + $0x370] sm:$0xff]
  %v126 = vld [vmem:[%s1 + $0x378] sm:$0xff]
  %v127 = vld [vmem:[%s1 + $0x380] sm:$0xff]
  %v128 = vld [vmem:[%s1 + $0x388] sm:$0xff]
  %v129 = vld [vmem:[%s1 + $0x390] sm:$0xff]
  %v130 = vld [vmem:[%s1 + $0x398] sm:$0xff]
  %v131 = vld [vmem:[%s1 + $0x3a0] sm:$0xff]
  %v132 = vld [vmem:[%s1 + $0x3a8] sm:$0xff]
  %v133 = vld [vmem:[%s1 + $0x3b0] sm:$0xff]
  %v134 = vld [vmem:[%s1 + $0x3b8] sm:$0xff]
  %v135 = vld [vmem:[%s1 + $0x3c0] sm:$0xff]
  %v136 = vld [vmem:[%s1 + $0x3c8] sm:$0xff]
  %v137 = vld [vmem:[%s1 + $0x3d0] sm:$0xff]
  %v138 = vld [vmem:[%s1 + $0x3d8] sm:$0xff]
  %v139 = vld [vmem:[%s1 + $0x3e0] sm:$0xff]
  %v140 = vld [vmem:[%s1 + $0x3e8] sm:$0xff]
  %v141 = vld [vmem:[%s1 + $0x3f0] sm:$0xff]
  %v142 = vld [vmem:[%s1 + $0x3f8] sm:$0xff]
  %v143 = vld [vmem:[%s2] sm:$0xff]
  %v145 = vlaneseq
  %v146 = vshrl.u32 %v145, 7
  %v147 = vsub.s32 0, %v146
  %v148 = vrot.slane %v143, %v147
  %v149 = vlaneseq
  %v150 = vshrl.u32 %v149, 7
  %v151 = vsub.s32 1, %v150
  %v152 = vrot.slane %v143, %v151
  %v153 = vlaneseq
  %v154 = vshrl.u32 %v153, 7
  %v155 = vsub.s32 2, %v154
  %v156 = vrot.slane %v143, %v155
  %v157 = vlaneseq
  %v158 = vshrl.u32 %v157, 7
  %v159 = vsub.s32 3, %v158
  %v160 = vrot.slane %v143, %v159
  %v161 = vlaneseq
  %v162 = vshrl.u32 %v161, 7
  %v163 = vsub.s32 4, %v162
  %v164 = vrot.slane %v143, %v163
  %v165 = vlaneseq
  %v166 = vshrl.u32 %v165, 7
  %v167 = vsub.s32 5, %v166
  %v168 = vrot.slane %v143, %v167
  %v169 = vlaneseq
  %v170 = vshrl.u32 %v169, 7
  %v171 = vsub.s32 6, %v170
  %v172 = vrot.slane %v143, %v171
  %v173 = vlaneseq
  %v174 = vshrl.u32 %v173, 7
  %v175 = vsub.s32 7, %v174
  %v176 = vrot.slane %v143, %v175
  %185 = vmatprep.subr.mxu0 %v16
  %186 = vmatpush1.msra.mxu0 %v15
  %187 = vmatprep.subr.mxu0 %v24
  %188 = vmatpush1.msra.mxu0 %v23
  %189 = vmatprep.subr.mxu0 %v32
  %190 = vmatpush1.msra.mxu0 %v31
  %191 = vmatprep.subr.mxu0 %v40
  %192 = vmatpush1.msra.mxu0 %v39
  %193 = vmatprep.subr.mxu0 %v48
  %194 = vmatpush1.msra.mxu0 %v47
  %195 = vmatprep.subr.mxu0 %v56
  %196 = vmatpush1.msra.mxu0 %v55
  %197 = vmatprep.subr.mxu0 %v64
  %198 = vmatpush1.msra.mxu0 %v63
  %199 = vmatprep.subr.mxu0 %v72
  %200 = vmatpush1.msra.mxu0 %v71
  %201 = vmatprep.subr.mxu0 %v80
  %202 = vmatpush1.msra.mxu0 %v79
  %203 = vmatprep.subr.mxu0 %v88
  %204 = vmatpush1.msra.mxu0 %v87
  %205 = vmatprep.subr.mxu0 %v96
  %206 = vmatpush1.msra.mxu0 %v95
  %207 = vmatprep.subr.mxu0 %v104
  %208 = vmatpush1.msra.mxu0 %v103
  %209 = vmatprep.subr.mxu0 %v112
  %210 = vmatpush1.msra.mxu0 %v111
  %211 = vmatprep.subr.mxu0 %v120
  %212 = vmatpush1.msra.mxu0 %v119
  %213 = vmatprep.subr.mxu0 %v128
  %214 = vmatpush1.msra.mxu0 %v127
  %215 = vmatprep.subr.mxu0 %v136
  %216 = vmatpush1.msra.mxu0 %v135
  %217 = vmatprep.subr.mxu0 0.0
  %218 = vmatpush1.msra.mxu0 0.0
  %219 = vmatprep.subr.mxu0 0.0
  %220 = vmatpush1.msra.mxu0 0.0
  %221 = vmatprep.subr.mxu0 0.0
  %222 = vmatpush1.msra.mxu0 0.0
  %223 = vmatprep.subr.mxu0 0.0
  %224 = vmatpush1.msra.mxu0 0.0
  %225 = vmatprep.subr.mxu0 0.0
  %226 = vmatpush1.msra.mxu0 0.0
  %227 = vmatprep.subr.mxu0 0.0
  %228 = vmatpush1.msra.mxu0 0.0
  %229 = vmatprep.subr.mxu0 0.0
  %230 = vmatpush1.msra.mxu0 0.0
  %231 = vmatprep.subr.mxu0 0.0
  %232 = vmatpush1.msra.mxu0 0.0
  %233 = vmatprep.subr.mxu0 0.0
  %234 = vmatpush1.msra.mxu0 0.0
  %235 = vmatprep.subr.mxu0 0.0
  %236 = vmatpush1.msra.mxu0 0.0
  %237 = vmatprep.subr.mxu0 0.0
  %238 = vmatpush1.msra.mxu0 0.0
  %239 = vmatprep.subr.mxu0 0.0
  %240 = vmatpush1.msra.mxu0 0.0
  %241 = vmatprep.subr.mxu0 0.0
  %242 = vmatpush1.msra.mxu0 0.0
  %243 = vmatprep.subr.mxu0 0.0
  %244 = vmatpush1.msra.mxu0 0.0
  %245 = vmatprep.subr.mxu0 0.0
  %246 = vmatpush1.msra.mxu0 0.0
  %247 = vmatprep.subr.mxu0 0.0
  %248 = vmatpush1.msra.mxu0 0.0
  %249 = vmatprep.mubr.f32.mxu0 0.0
  %250 = vmatmul.mubr.f32.gmra.mrb[0].mxu0 %v14
  %v251 = vpop.f32.mrb[0].mxu0
  %v252 = vadd.f32 %v148, %v251
  %v253 = vpop.f32.mrb[0].mxu0
  %v254 = vadd.f32 %v152, %v253
  %255 = vdwg.mxu0
  %256 = vmatprep.subr.mxu0 %v18
  %257 = vmatpush1.msra.mxu0 %v17
  %258 = vmatprep.subr.mxu0 %v26
  %259 = vmatpush1.msra.mxu0 %v25
  %260 = vmatprep.subr.mxu0 %v34
  %261 = vmatpush1.msra.mxu0 %v33
  %262 = vmatprep.subr.mxu0 %v42
  %263 = vmatpush1.msra.mxu0 %v41
  %264 = vmatprep.subr.mxu0 %v50
  %265 = vmatpush1.msra.mxu0 %v49
  %266 = vmatprep.subr.mxu0 %v58
  %267 = vmatpush1.msra.mxu0 %v57
  %268 = vmatprep.subr.mxu0 %v66
  %269 = vmatpush1.msra.mxu0 %v65
  %270 = vmatprep.subr.mxu0 %v74
  %271 = vmatpush1.msra.mxu0 %v73
  %272 = vmatprep.subr.mxu0 %v82
  %273 = vmatpush1.msra.mxu0 %v81
  %274 = vmatprep.subr.mxu0 %v90
  %275 = vmatpush1.msra.mxu0 %v89
  %276 = vmatprep.subr.mxu0 %v98
  %277 = vmatpush1.msra.mxu0 %v97
  %278 = vmatprep.subr.mxu0 %v106
  %279 = vmatpush1.msra.mxu0 %v105
  %280 = vmatprep.subr.mxu0 %v114
  %281 = vmatpush1.msra.mxu0 %v113
  %282 = vmatprep.subr.mxu0 %v122
  %283 = vmatpush1.msra.mxu0 %v121
  %284 = vmatprep.subr.mxu0 %v130
  %285 = vmatpush1.msra.mxu0 %v129
  %286 = vmatprep.subr.mxu0 %v138
  %287 = vmatpush1.msra.mxu0 %v137
  %288 = vmatprep.subr.mxu0 0.0
  %289 = vmatpush1.msra.mxu0 0.0
  %290 = vmatprep.subr.mxu0 0.0
  %291 = vmatpush1.msra.mxu0 0.0
  %292 = vmatprep.subr.mxu0 0.0
  %293 = vmatpush1.msra.mxu0 0.0
  %294 = vmatprep.subr.mxu0 0.0
  %295 = vmatpush1.msra.mxu0 0.0
  %296 = vmatprep.subr.mxu0 0.0
  %297 = vmatpush1.msra.mxu0 0.0
  %298 = vmatprep.subr.mxu0 0.0
  %299 = vmatpush1.msra.mxu0 0.0
  %300 = vmatprep.subr.mxu0 0.0
  %301 = vmatpush1.msra.mxu0 0.0
  %302 = vmatprep.subr.mxu0 0.0
  %303 = vmatpush1.msra.mxu0 0.0
  %304 = vmatprep.subr.mxu0 0.0
  %305 = vmatpush1.msra.mxu0 0.0
  %306 = vmatprep.subr.mxu0 0.0
  %307 = vmatpush1.msra.mxu0 0.0
  %308 = vmatprep.subr.mxu0 0.0
  %309 = vmatpush1.msra.mxu0 0.0
  %310 = vmatprep.subr.mxu0 0.0
  %311 = vmatpush1.msra.mxu0 0.0
  %312 = vmatprep.subr.mxu0 0.0
  %313 = vmatpush1.msra.mxu0 0.0
  %314 = vmatprep.subr.mxu0 0.0
  %315 = vmatpush1.msra.mxu0 0.0
  %316 = vmatprep.subr.mxu0 0.0
  %317 = vmatpush1.msra.mxu0 0.0
  %318 = vmatprep.subr.mxu0 0.0
  %319 = vmatpush1.msra.mxu0 0.0
  %320 = vmatprep.mubr.f32.mxu0 0.0
  %321 = vmatmul.mubr.f32.gmra.mrb[0].mxu0 %v14
  %v322 = vpop.f32.mrb[0].mxu0
  %v323 = vadd.f32 %v156, %v322
  %v324 = vpop.f32.mrb[0].mxu0
  %v325 = vadd.f32 %v160, %v324
  %326 = vdwg.mxu0
  %327 = vmatprep.subr.mxu0 %v20
  %328 = vmatpush1.msra.mxu0 %v19
  %329 = vmatprep.subr.mxu0 %v28
  %330 = vmatpush1.msra.mxu0 %v27
  %331 = vmatprep.subr.mxu0 %v36
  %332 = vmatpush1.msra.mxu0 %v35
  %333 = vmatprep.subr.mxu0 %v44
  %334 = vmatpush1.msra.mxu0 %v43
  %335 = vmatprep.subr.mxu0 %v52
  %336 = vmatpush1.msra.mxu0 %v51
  %337 = vmatprep.subr.mxu0 %v60
  %338 = vmatpush1.msra.mxu0 %v59
  %339 = vmatprep.subr.mxu0 %v68
  %340 = vmatpush1.msra.mxu0 %v67
  %341 = vmatprep.subr.mxu0 %v76
  %342 = vmatpush1.msra.mxu0 %v75
  %343 = vmatprep.subr.mxu0 %v84
  %344 = vmatpush1.msra.mxu0 %v83
  %345 = vmatprep.subr.mxu0 %v92
  %346 = vmatpush1.msra.mxu0 %v91
  %347 = vmatprep.subr.mxu0 %v100
  %348 = vmatpush1.msra.mxu0 %v99
  %349 = vmatprep.subr.mxu0 %v108
  %350 = vmatpush1.msra.mxu0 %v107
  %351 = vmatprep.subr.mxu0 %v116
  %352 = vmatpush1.msra.mxu0 %v115
  %353 = vmatprep.subr.mxu0 %v124
  %354 = vmatpush1.msra.mxu0 %v123
  %355 = vmatprep.subr.mxu0 %v132
  %356 = vmatpush1.msra.mxu0 %v131
  %357 = vmatprep.subr.mxu0 %v140
  %358 = vmatpush1.msra.mxu0 %v139
  %359 = vmatprep.subr.mxu0 0.0
  %360 = vmatpush1.msra.mxu0 0.0
  %361 = vmatprep.subr.mxu0 0.0
  %362 = vmatpush1.msra.mxu0 0.0
  %363 = vmatprep.subr.mxu0 0.0
  %364 = vmatpush1.msra.mxu0 0.0
  %365 = vmatprep.subr.mxu0 0.0
  %366 = vmatpush1.msra.mxu0 0.0
  %367 = vmatprep.subr.mxu0 0.0
  %368 = vmatpush1.msra.mxu0 0.0
  %369 = vmatprep.subr.mxu0 0.0
  %370 = vmatpush1.msra.mxu0 0.0
  %371 = vmatprep.subr.mxu0 0.0
  %372 = vmatpush1.msra.mxu0 0.0
  %373 = vmatprep.subr.mxu0 0.0
  %374 = vmatpush1.msra.mxu0 0.0
  %375 = vmatprep.subr.mxu0 0.0
  %376 = vmatpush1.msra.mxu0 0.0
  %377 = vmatprep.subr.mxu0 0.0
  %378 = vmatpush1.msra.mxu0 0.0
  %379 = vmatprep.subr.mxu0 0.0
  %380 = vmatpush1.msra.mxu0 0.0
  %381 = vmatprep.subr.mxu0 0.0
  %382 = vmatpush1.msra.mxu0 0.0
  %383 = vmatprep.subr.mxu0 0.0
  %384 = vmatpush1.msra.mxu0 0.0
  %385 = vmatprep.subr.mxu0 0.0
  %386 = vmatpush1.msra.mxu0 0.0
  %387 = vmatprep.subr.mxu0 0.0
  %388 = vmatpush1.msra.mxu0 0.0
  %389 = vmatprep.subr.mxu0 0.0
  %390 = vmatpush1.msra.mxu0 0.0
  %391 = vmatprep.mubr.f32.mxu0 0.0
  %392 = vmatmul.mubr.f32.gmra.mrb[0].mxu0 %v14
  %v393 = vpop.f32.mrb[0].mxu0
  %v394 = vadd.f32 %v164, %v393
  %v395 = vpop.f32.mrb[0].mxu0
  %v396 = vadd.f32 %v168, %v395
  %397 = vdwg.mxu0
  %398 = vmatprep.subr.mxu0 %v22
  %399 = vmatpush1.msra.mxu0 %v21
  %400 = vmatprep.subr.mxu0 %v30
  %401 = vmatpush1.msra.mxu0 %v29
  %402 = vmatprep.subr.mxu0 %v38
  %403 = vmatpush1.msra.mxu0 %v37
  %404 = vmatprep.subr.mxu0 %v46
  %405 = vmatpush1.msra.mxu0 %v45
  %406 = vmatprep.subr.mxu0 %v54
  %407 = vmatpush1.msra.mxu0 %v53
  %408 = vmatprep.subr.mxu0 %v62
  %409 = vmatpush1.msra.mxu0 %v61
  %410 = vmatprep.subr.mxu0 %v70
  %411 = vmatpush1.msra.mxu0 %v69
  %412 = vmatprep.subr.mxu0 %v78
  %413 = vmatpush1.msra.mxu0 %v77
  %414 = vmatprep.subr.mxu0 %v86
  %415 = vmatpush1.msra.mxu0 %v85
  %416 = vmatprep.subr.mxu0 %v94
  %417 = vmatpush1.msra.mxu0 %v93
  %418 = vmatprep.subr.mxu0 %v102
  %419 = vmatpush1.msra.mxu0 %v101
  %420 = vmatprep.subr.mxu0 %v110
  %421 = vmatpush1.msra.mxu0 %v109
  %422 = vmatprep.subr.mxu0 %v118
  %423 = vmatpush1.msra.mxu0 %v117
  %424 = vmatprep.subr.mxu0 %v126
  %425 = vmatpush1.msra.mxu0 %v125
  %426 = vmatprep.subr.mxu0 %v134
  %427 = vmatpush1.msra.mxu0 %v133
  %428 = vmatprep.subr.mxu0 %v142
  %429 = vmatpush1.msra.mxu0 %v141
  %430 = vmatprep.subr.mxu0 0.0
  %431 = vmatpush1.msra.mxu0 0.0
  %432 = vmatprep.subr.mxu0 0.0
  %433 = vmatpush1.msra.mxu0 0.0
  %434 = vmatprep.subr.mxu0 0.0
  %435 = vmatpush1.msra.mxu0 0.0
  %436 = vmatprep.subr.mxu0 0.0
  %437 = vmatpush1.msra.mxu0 0.0
  %438 = vmatprep.subr.mxu0 0.0
  %439 = vmatpush1.msra.mxu0 0.0
  %440 = vmatprep.subr.mxu0 0.0
  %441 = vmatpush1.msra.mxu0 0.0
  %442 = vmatprep.subr.mxu0 0.0
  %443 = vmatpush1.msra.mxu0 0.0
  %444 = vmatprep.subr.mxu0 0.0
  %445 = vmatpush1.msra.mxu0 0.0
  %446 = vmatprep.subr.mxu0 0.0
  %447 = vmatpush1.msra.mxu0 0.0
  %448 = vmatprep.subr.mxu0 0.0
  %449 = vmatpush1.msra.mxu0 0.0
  %450 = vmatprep.subr.mxu0 0.0
  %451 = vmatpush1.msra.mxu0 0.0
  %452 = vmatprep.subr.mxu0 0.0
  %453 = vmatpush1.msra.mxu0 0.0
  %454 = vmatprep.subr.mxu0 0.0
  %455 = vmatpush1.msra.mxu0 0.0
  %456 = vmatprep.subr.mxu0 0.0
  %457 = vmatpush1.msra.mxu0 0.0
  %458 = vmatprep.subr.mxu0 0.0
  %459 = vmatpush1.msra.mxu0 0.0
  %460 = vmatprep.subr.mxu0 0.0
  %461 = vmatpush1.msra.mxu0 0.0
  %462 = vmatprep.mubr.f32.mxu0 0.0
  %463 = vmatmul.mubr.f32.gmra.mrb[0].mxu0 %v14
  %v464 = vpop.f32.mrb[0].mxu0
  %v465 = vadd.f32 %v172, %v464
  %v466 = vpop.f32.mrb[0].mxu0
  %v467 = vadd.f32 %v176, %v466
  %468 = vdwg.mxu0
  %v477 = vcombine.low %v252, %v254
  %v478 = vcombine.low %v323, %v325
  %v479 = vcombine.low %v394, %v396
  %v480 = vcombine.low %v465, %v467
  %485 = vst [vmem:[%s3] sm:$0xff] %v477
  %486 = vst [vmem:[%s3 + $0x8] sm:$0xff] %v478
  %487 = vst [vmem:[%s3 + $0x10] sm:$0xff] %v479
  %488 = vst [vmem:[%s3 + $0x18] sm:$0xff] %v480
  // Predicated region
  $region14: #{secondary_structure_embedder.1} parent=0 // pred_check
    _
  $region15: #{secondary_structure_embedder.1} parent=0 // pred_check_branch
    %490 = sbr.rel (0) target = $region17
  $region16: #{secondary_structure_embedder.1} parent=0 // pred_region
    _
  $region17: #{secondary_structure_embedder.1} parent=0 // pred_fallthru
    _
  // Predicated region
  $region18: #{secondary_structure_embedder.1} parent=0 // pred_check
    _
  $region19: #{secondary_structure_embedder.1} parent=0 // pred_check_branch
    %492 = sbr.rel (0) target = $region21
  $region20: #{secondary_structure_embedder.1} parent=0 // pred_region
    _
  $region21: #{secondary_structure_embedder.1} parent=0 // pred_fallthru
    _

</llo_original>
